<compile_context>
chip_gen: v5e
topology: v5e:2x2
jax: 0.10.0
libtpu: 0.0.40
codegen_flags: <defaults>
</compile_context>

<pallas_src>
import functools

import jax
import jax.numpy as jnp
from jax.experimental import pallas as pl
from jax.experimental.pallas import tpu as pltpu


def _value_net_kernel(x_ref, p_ref, out_ref, *, state_size, hidden_size):
    S, H = state_size, hidden_size
    x = x_ref[...]                                        # [Bt, S]  f32

    # Param slab layout (static slices of a VMEM ref view are free):
    #   rows 0..S-1      : w1[k, :H]
    #   row  S           : b1[:H]
    #   row  S+1         : w2[:H]
    #   row  S+2, lane 0 : b2
    h = p_ref[S:S + 1, 0:H]                               # [1, H]  bias (broadcasts)
    for k in range(S):                                    # S unrolled VPU mul-adds
        h = h + x[:, k:k + 1] * p_ref[k:k + 1, 0:H]       # [Bt,1]*[1,H] -> [Bt,H]
    h = jnp.maximum(h, 0.0)                               # ReLU (VPU)

    w2_row = p_ref[S + 1:S + 2, 0:H]                      # [1, H]
    b2 = p_ref[S + 2:S + 3, 0:1]                          # [1, 1]
    v = jnp.sum(h * w2_row, axis=-1, keepdims=True) + b2  # lane reduce (XLU), [Bt,1]
    out_ref[...] = v.astype(out_ref.dtype)


def pack_params(w1, b1, w2, b2):
    """Pack fc1/fc2 params into a single (8,128) f32 slab (one VMEM tile)."""
    S, H = w1.shape
    assert S + 3 <= 8 and H <= 128, "packing layout assumes state_size<=5, hidden<=128"
    slab = jnp.zeros((8, 128), jnp.float32)
    slab = slab.at[0:S, 0:H].set(w1.astype(jnp.float32))
    slab = slab.at[S, 0:H].set(jnp.reshape(b1, (-1,)).astype(jnp.float32))
    slab = slab.at[S + 1, 0:H].set(jnp.reshape(w2, (-1,)).astype(jnp.float32))
    slab = slab.at[S + 2, 0].set(jnp.reshape(jnp.asarray(b2, jnp.float32), ()))
    return slab


def value_network(x, w1, b1, w2, b2, *, block_b=None):
    """x: [B, state_size] f32 -> [B, 1] f32 (matches ValueNetwork.forward)."""
    B, S = x.shape
    H = w1.shape[1]
    params = pack_params(w1, b1, w2, b2)

    # Multiple-of-8 sublane tile over the batch; cap at 2048 rows per step.
    if block_b is None:
        block_b = min(2048, 8 * pl.cdiv(B, 8))
    block_b = max(8, 8 * pl.cdiv(block_b, 8))
    grid_b = pl.cdiv(B, block_b)
    b_pad = grid_b * block_b
    if b_pad != B:
        x = jnp.pad(x, ((0, b_pad - B), (0, 0)))

    kernel = functools.partial(_value_net_kernel, state_size=S, hidden_size=H)
    out = pl.pallas_call(
        kernel,
        out_shape=jax.ShapeDtypeStruct((b_pad, 1), jnp.float32),
        grid_spec=pltpu.PrefetchScalarGridSpec(
            num_scalar_prefetch=0,
            grid=(grid_b,),
            in_specs=[
                pl.BlockSpec((block_b, S), lambda i: (i, 0)),   # x batch tile
                pl.BlockSpec((8, 128), lambda i: (0, 0)),       # resident param slab
            ],
            out_specs=pl.BlockSpec((block_b, 1), lambda i: (i, 0)),
        ),
        compiler_params=pltpu.CompilerParams(
            dimension_semantics=("parallel",),   # v7x: shard batch over both TCs
        ),
    )(x, params)
    return out[:B]


def init_params(key, state_size=4, hidden_size=32):
    # Deterministic synthetic init (uniform in +/- 1/sqrt(fan_in), like
    # torch.nn.Linear's default), stored in [in, out] layout for the kernel.
    k1, k2, k3, k4 = jax.random.split(key, 4)
    lim1 = 1.0 / jnp.sqrt(jnp.float32(state_size))
    lim2 = 1.0 / jnp.sqrt(jnp.float32(hidden_size))
    w1 = jax.random.uniform(k1, (state_size, hidden_size), jnp.float32, -lim1, lim1)
    b1 = jax.random.uniform(k2, (1, hidden_size), jnp.float32, -lim1, lim1)
    w2 = jax.random.uniform(k3, (hidden_size, 1), jnp.float32, -lim2, lim2)
    b2 = jax.random.uniform(k4, (1, 1), jnp.float32, -lim2, lim2)
    return w1, b1, w2, b2


if __name__ == "__main__":
    key = jax.random.PRNGKey(0)
    kx, kp, kx2 = jax.random.split(key, 3)

    B, STATE, HIDDEN = 8, 4, 32
    x = jax.random.normal(kx, (B, STATE), jnp.float32)
    w1, b1, w2, b2 = init_params(kp, STATE, HIDDEN)

    out = jax.block_until_ready(value_network(x, w1, b1, w2, b2))
    ref = jnp.maximum(x @ w1 + b1, 0.0) @ w2 + b2
    assert out.shape == (B, 1)
    assert jnp.allclose(out, ref, atol=1e-5, rtol=1e-5)

    # Exercise the batch grid + padding path (grid > 1, B not a tile multiple).
    B2 = 50
    x2 = jax.random.normal(kx2, (B2, STATE), jnp.float32)
    out2 = jax.block_until_ready(value_network(x2, w1, b1, w2, b2, block_b=8))
    ref2 = jnp.maximum(x2 @ w1 + b1, 0.0) @ w2 + b2
    assert out2.shape == (B2, 1)
    assert jnp.allclose(out2, ref2, atol=1e-5, rtol=1e-5)

    print("KERNEL_OK")
</pallas_src>

<mosaic_0001>
module attributes {stable_mosaic.version = 11 : i64} {
  func.func @_value_net_kernel(%arg0: i32, %arg1: memref<8x4xf32, #tpu.memory_space<vmem>>, %arg2: memref<8x128xf32, #tpu.memory_space<vmem>>, %arg3: memref<8x1xf32, #tpu.memory_space<vmem>>) attributes {dimension_semantics = [#tpu.dimension_semantics<parallel>], iteration_bounds = array<i64: 1>, scalar_prefetch = 0 : i64, scratch_operands = 0 : i64, tpu.core_type = #tpu.core_type<tc>, window_params = [{transform_indices = @transform_0, window_bounds = array<i64: 8, 4>}, {pipeline_mode = #tpu.pipeline_mode<synchronous>, transform_indices = @transform_1, window_bounds = array<i64: 8, 128>}, {transform_indices = @transform_2, window_bounds = array<i64: 8, 1>}]} {
    %c0 = arith.constant 0 : index
    %c0_0 = arith.constant 0 : index
    %0 = vector.load %arg1[%c0, %c0_0] : memref<8x4xf32, #tpu.memory_space<vmem>>, vector<8x4xf32>
    %c4 = arith.constant 4 : index
    %c0_1 = arith.constant 0 : index
    %1 = vector.load %arg2[%c4, %c0_1] : memref<8x128xf32, #tpu.memory_space<vmem>>, vector<1x32xf32>
    %2 = vector.extract_strided_slice %0 {offsets = [0, 0], sizes = [8, 1], strides = [1, 1]} : vector<8x4xf32> to vector<8x1xf32>
    %c0_2 = arith.constant 0 : index
    %c0_3 = arith.constant 0 : index
    %3 = vector.load %arg2[%c0_2, %c0_3] : memref<8x128xf32, #tpu.memory_space<vmem>>, vector<1x32xf32>
    %4 = vector.broadcast %2 : vector<8x1xf32> to vector<8x32xf32>
    %5 = vector.broadcast %3 : vector<1x32xf32> to vector<8x32xf32>
    %6 = arith.mulf %4, %5 : vector<8x32xf32>
    %7 = vector.broadcast %1 : vector<1x32xf32> to vector<8x32xf32>
    %8 = arith.addf %7, %6 : vector<8x32xf32>
    %9 = vector.extract_strided_slice %0 {offsets = [0, 1], sizes = [8, 1], strides = [1, 1]} : vector<8x4xf32> to vector<8x1xf32>
    %c1 = arith.constant 1 : index
    %c0_4 = arith.constant 0 : index
    %10 = vector.load %arg2[%c1, %c0_4] : memref<8x128xf32, #tpu.memory_space<vmem>>, vector<1x32xf32>
    %11 = vector.broadcast %9 : vector<8x1xf32> to vector<8x32xf32>
    %12 = vector.broadcast %10 : vector<1x32xf32> to vector<8x32xf32>
    %13 = arith.mulf %11, %12 : vector<8x32xf32>
    %14 = arith.addf %8, %13 : vector<8x32xf32>
    %15 = vector.extract_strided_slice %0 {offsets = [0, 2], sizes = [8, 1], strides = [1, 1]} : vector<8x4xf32> to vector<8x1xf32>
    %c2 = arith.constant 2 : index
    %c0_5 = arith.constant 0 : index
    %16 = vector.load %arg2[%c2, %c0_5] : memref<8x128xf32, #tpu.memory_space<vmem>>, vector<1x32xf32>
    %17 = vector.broadcast %15 : vector<8x1xf32> to vector<8x32xf32>
    %18 = vector.broadcast %16 : vector<1x32xf32> to vector<8x32xf32>
    %19 = arith.mulf %17, %18 : vector<8x32xf32>
    %20 = arith.addf %14, %19 : vector<8x32xf32>
    %21 = vector.extract_strided_slice %0 {offsets = [0, 3], sizes = [8, 1], strides = [1, 1]} : vector<8x4xf32> to vector<8x1xf32>
    %c3 = arith.constant 3 : index
    %c0_6 = arith.constant 0 : index
    %22 = vector.load %arg2[%c3, %c0_6] : memref<8x128xf32, #tpu.memory_space<vmem>>, vector<1x32xf32>
    %23 = vector.broadcast %21 : vector<8x1xf32> to vector<8x32xf32>
    %24 = vector.broadcast %22 : vector<1x32xf32> to vector<8x32xf32>
    %25 = arith.mulf %23, %24 : vector<8x32xf32>
    %26 = arith.addf %20, %25 : vector<8x32xf32>
    %cst = arith.constant 0.000000e+00 : f32
    %27 = vector.broadcast %cst : f32 to vector<8x32xf32>
    %28 = arith.maximumf %26, %27 : vector<8x32xf32>
    %c5 = arith.constant 5 : index
    %c0_7 = arith.constant 0 : index
    %29 = vector.load %arg2[%c5, %c0_7] : memref<8x128xf32, #tpu.memory_space<vmem>>, vector<1x32xf32>
    %c6 = arith.constant 6 : index
    %c0_8 = arith.constant 0 : index
    %30 = vector.load %arg2[%c6, %c0_8] : memref<8x128xf32, #tpu.memory_space<vmem>>, vector<1x1xf32>
    %31 = vector.broadcast %29 : vector<1x32xf32> to vector<8x32xf32>
    %32 = arith.mulf %28, %31 : vector<8x32xf32>
    %cst_9 = arith.constant dense<0.000000e+00> : vector<8xf32>
    %33 = vector.multi_reduction <add>, %32, %cst_9 [1] : vector<8x32xf32> to vector<8xf32>
    %34 = vector.shape_cast %33 : vector<8xf32> to vector<8x1xf32>
    %35 = vector.broadcast %30 : vector<1x1xf32> to vector<8x1xf32>
    %36 = arith.addf %34, %35 : vector<8x1xf32>
    %c0_10 = arith.constant 0 : index
    %c0_11 = arith.constant 0 : index
    %37 = vector.load %arg3[%c0_10, %c0_11] : memref<8x1xf32, #tpu.memory_space<vmem>>, vector<8x1xf32>
    tpu.vector_store %arg3[%c0_10, %c0_11], %36 {strides = array<i32>} : memref<8x1xf32, #tpu.memory_space<vmem>>, vector<8x1xf32>,
    return
  }
  func.func @transform_0(%arg0: i32) -> (i32, i32) {
    %c0_i32 = arith.constant 0 : i32
    %c0_i32_0 = arith.constant 0 : i32
    return %arg0, %c0_i32 : i32, i32
  }
  func.func @transform_1(%arg0: i32) -> (i32, i32) {
    %c0_i32 = arith.constant 0 : i32
    %c0_i32_0 = arith.constant 0 : i32
    %c0_i32_1 = arith.constant 0 : i32
    return %c0_i32, %c0_i32_0 : i32, i32
  }
  func.func @transform_2(%arg0: i32) -> (i32, i32) {
    %c0_i32 = arith.constant 0 : i32
    %c0_i32_0 = arith.constant 0 : i32
    return %arg0, %c0_i32 : i32, i32
  }
}

</mosaic_0001>

<llo_original>
// kernel: tpu_custom_call.1
$region0: #{tpu_custom_call.1}
  #allocation0 [shape = 'u32[]', space=smem, size = 0x4, offset = 0x4, fixed_abs, tag = 'smem constant byte address 0x4 - core index']
  #allocation1 [shape = 'u32[72,128]{1,0:T(1,128)}', space=vmem, size = 0x9000, scoped, tag = 'internal scratch']
  %s0 = inlined_call_operand.vmem [shape: f32[8,4], index: 0, kind: input, shape index: {}]
  %s1 = inlined_call_operand.vmem [shape: f32[8,128], index: 1, kind: input, shape index: {}]
  %s2 = inlined_call_operand.vmem [shape: f32[8,1], index: 2, kind: output, shape index: {}]
  %s3 = sld [smem:[#allocation0]]
  $region18: #{tpu_custom_call.1} parent=0
    _
  %s5 = ssub.s32 1, %s3
  %s6 = scalar_select 0, %s5, %s3
  // Predicated region
  $region2: #{tpu_custom_call.1} parent=0 // pred_check
    _
  $region3: #{tpu_custom_call.1} parent=0 // pred_check_branch
    %8 = sbr.rel (0) target = $region5
  $region4: #{tpu_custom_call.1} parent=0 // pred_region
    _
  $region5: #{tpu_custom_call.1} parent=0 // pred_fallthru
    _
  // Predicated region
  $region6: #{tpu_custom_call.1} parent=0 // pred_check
    _
  $region7: #{tpu_custom_call.1} parent=0 // pred_check_branch
    %10 = sbr.rel (0) target = $region9
  $region8: #{tpu_custom_call.1} parent=0 // pred_region
    _
  $region9: #{tpu_custom_call.1} parent=0 // pred_fallthru
    _
  %v11 = vld [vmem:[%s0] sm:$0xff]
  %v12 = vld [vmem:[%s1 + $0x4] sm:$0x1]
  %v13 = vld [vmem:[%s1] sm:$0x1]
  %15 = vset.pattern.permute.xlu0 0
  %16 = vperm.xlu0 %15, %v11
  %v17 = vpop.permute.xlu0 %16
  %v19 = vperm.slane %v13, 0
  %v20 = vmul.f32 %v17, %v19
  %v21 = vperm.slane %v12, 0
  %v22 = vadd.f32 %v21, %v20
  %v23 = vld [vmem:[%s1 + $0x1] sm:$0x1]
  %24 = vset.pattern.permute.xlu0 1
  %25 = vperm.xlu0 %24, %v11
  %v26 = vpop.permute.xlu0 %25
  %v28 = vperm.slane %v23, 0
  %v29 = vmul.f32 %v26, %v28
  %v30 = vadd.f32 %v22, %v29
  %v31 = vld [vmem:[%s1 + $0x2] sm:$0x1]
  %32 = vset.pattern.permute.xlu0 2
  %33 = vperm.xlu0 %32, %v11
  %v34 = vpop.permute.xlu0 %33
  %v36 = vperm.slane %v31, 0
  %v37 = vmul.f32 %v34, %v36
  %v38 = vadd.f32 %v30, %v37
  %v39 = vld [vmem:[%s1 + $0x3] sm:$0x1]
  %40 = vset.pattern.permute.xlu0 3
  %41 = vperm.xlu0 %40, %v11
  %v42 = vpop.permute.xlu0 %41
  %v44 = vperm.slane %v39, 0
  %v45 = vmul.f32 %v42, %v44
  %v46 = vadd.f32 %v38, %v45
  %v47 = vmax.f32 %v46, 0.0
  %v48 = vld [vmem:[%s1 + $0x5] sm:$0x1]
  %v49 = vld [vmem:[%s1 + $0x6] sm:$0x1]
  %v50 = vperm.slane %v48, 0
  %v51 = vmul.f32 %v47, %v50
  %vm52 = vcmask 261120
  %v53 = vsel %vm52, %v51, 0.0
  %54 = vadd.xlane.f32.xlu0 %v53
  %v55 = vpop.xlane.xlu0 %54
  %v56 = vperm.slane %v49, 0
  %v57 = vadd.f32 %v55, %v56
  %vm58 = vcmask 7168
  %59 = vst.msk [vmem:[%s2] sm:$0xff] %vm58, %v57
  // Predicated region
  $region10: #{tpu_custom_call.1} parent=0 // pred_check
    _
  $region11: #{tpu_custom_call.1} parent=0 // pred_check_branch
    %61 = sbr.rel (0) target = $region13
  $region12: #{tpu_custom_call.1} parent=0 // pred_region
    _
  $region13: #{tpu_custom_call.1} parent=0 // pred_fallthru
    _
  // Predicated region
  $region14: #{tpu_custom_call.1} parent=0 // pred_check
    _
  $region15: #{tpu_custom_call.1} parent=0 // pred_check_branch
    %63 = sbr.rel (0) target = $region17
  $region16: #{tpu_custom_call.1} parent=0 // pred_region
    _
  $region17: #{tpu_custom_call.1} parent=0 // pred_fallthru
    _

</llo_original>
